<compile_context>
chip_gen: v7x
topology: tpu7x:2x2x1
jax: 0.10.0
libtpu: 0.0.40
codegen_flags: <defaults>
</compile_context>

<pallas_src>
import functools

import jax
import jax.numpy as jnp
from jax import lax
from jax.experimental import pallas as pl
from jax.experimental.pallas import tpu as pltpu

_LANES = 128
# (4096, 128) f32 block = 2 MiB.  VMEM budget: 3 inputs x 2 buffers x 2 MiB
# = 12 MiB (+ ~1 KiB accumulators/outputs) -> fits v5e's 16 MiB default
# scoped VMEM and leaves ample headroom on v6e (32/128) and v7x (32/64).
_MAX_TILE_ROWS = 4096
# v7x has 2 TensorCores per chip; on v5e/v6e the extra parallel grid entry
# just runs sequentially on the single core (correct, negligible overhead).
_NUM_CORES = 2


def _fused_sse_kernel(*refs, num_preds, spc, nblocks, full_blocks, rem_rows,
                      tile_rows, inv_n):
    """Accumulate per-lane partial sums of (pred - tgt)^2 for each prediction.

    Steady state: one block load per input + a VPU/XLU reduce into a (1,128)
    VMEM accumulator (no tile-sized accumulator RMW).  The last (partial)
    block is masked with a static row count; fully out-of-range grid steps
    (core-count round-up) fall through both branches and contribute nothing.
    """
    pred_refs = refs[:num_preds]
    tgt_ref = refs[num_preds]
    out_refs = refs[num_preds + 1:2 * num_preds + 1]
    acc_refs = refs[2 * num_preds + 1:]

    c = pl.program_id(0)          # parallel (core) axis
    s = pl.program_id(1)          # arbitrary (reduction) axis
    g = c * spc + s               # global block index

    @pl.when(s == 0)
    def _init():
        for acc in acc_refs:
            acc[...] = jnp.zeros_like(acc)

    def _accumulate(masked):
        t = tgt_ref[...].astype(jnp.float32)
        if masked:
            row = lax.broadcasted_iota(jnp.int32, (tile_rows, _LANES), 0)
            keep = row < rem_rows
        for p_ref, acc in zip(pred_refs, acc_refs):
            d = p_ref[...].astype(jnp.float32) - t
            sq = d * d
            if masked:
                # Garbage rows of the partial block (and any NaNs they breed)
                # are replaced by 0 before the reduction.
                sq = jnp.where(keep, sq, 0.0)
            acc[...] += jnp.sum(sq, axis=0, keepdims=True)

    @pl.when(g < full_blocks)
    def _full():
        _accumulate(masked=False)

    if rem_rows != tile_rows:     # static: last block is partial
        @pl.when(g == nblocks - 1)
        def _tail():
            _accumulate(masked=True)

    @pl.when(s == spc - 1)
    def _finalize():
        # Fold the 1/n scaling here; lane-dense (1,128) store per core.
        for out, acc in zip(out_refs, acc_refs):
            out[...] = acc[...] * inv_n


def fused_img2mse_pallas(preds, tgt):
    """mean((p - tgt)^2) for every p in `preds`, fused into one streaming pass."""
    preds = tuple(preds)
    num_preds = len(preds)
    assert num_preds >= 1
    for p in preds:
        assert p.shape == tgt.shape and p.dtype == tgt.dtype

    n = tgt.size
    inv_n = 1.0 / float(n)

    flat = [p.reshape(-1) for p in preds] + [tgt.reshape(-1)]
    pad = (-n) % _LANES
    if pad:
        # Only the (rare) sub-lane tail ever gets padded; tile-granularity
        # alignment is handled inside the kernel with a row mask, so there is
        # no full-array padding copy on misaligned sizes.
        flat = [jnp.pad(f, (0, pad)) for f in flat]
    rows = (n + pad) // _LANES
    arrs = [f.reshape(rows, _LANES) for f in flat]

    if rows <= _MAX_TILE_ROWS:
        tile_rows = rows                      # single block = full sublane extent
    else:
        tile_rows = _MAX_TILE_ROWS            # multiple of 8

    nblocks = -(-rows // tile_rows)
    rem_rows = rows - (nblocks - 1) * tile_rows      # rows in the last block
    full_blocks = nblocks if rem_rows == tile_rows else nblocks - 1

    num_cores = min(_NUM_CORES, nblocks)
    spc = -(-nblocks // num_cores)                   # steps per core

    if num_cores * spc == nblocks:
        in_map = lambda c, s: (c * spc + s, 0)
    else:
        # Clamp the (at most num_cores-1) round-up steps onto the last valid
        # block; the kernel skips their accumulation entirely.
        in_map = lambda c, s: (jnp.minimum(c * spc + s, nblocks - 1), 0)

    in_spec = pl.BlockSpec((tile_rows, _LANES), in_map)
    out_spec = pl.BlockSpec((1, _LANES), lambda c, s: (c, 0))

    kernel = functools.partial(
        _fused_sse_kernel, num_preds=num_preds, spc=spc, nblocks=nblocks,
        full_blocks=full_blocks, rem_rows=rem_rows, tile_rows=tile_rows,
        inv_n=inv_n)

    partials = pl.pallas_call(
        kernel,
        out_shape=tuple(jax.ShapeDtypeStruct((num_cores, _LANES), jnp.float32)
                        for _ in range(num_preds)),
        grid_spec=pltpu.PrefetchScalarGridSpec(
            num_scalar_prefetch=0,
            grid=(num_cores, spc),
            in_specs=[in_spec] * (num_preds + 1),
            out_specs=tuple(out_spec for _ in range(num_preds)),
            scratch_shapes=[pltpu.VMEM((1, _LANES), jnp.float32)
                            for _ in range(num_preds)],
        ),
        compiler_params=pltpu.CompilerParams(
            dimension_semantics=("parallel", "arbitrary"),
        ),
    )(*arrs)

    if not isinstance(partials, (tuple, list)):
        partials = (partials,)
    # Each partial is (num_cores, 128) of per-lane mean contributions.
    return tuple(jnp.sum(p) for p in partials)


def synthetic_render(batch, key):
    """Deterministic stand-in for volume_renderer.Renderer(net).render(batch)."""
    # TODO(synk): the real renderer/net are external components; synthesized here.
    k0, k1 = jax.random.split(key)
    shape = batch["rgb"].shape
    return {
        "rgb_map": jax.random.uniform(k0, shape, dtype=jnp.float32),
        "rgb0": jax.random.uniform(k1, shape, dtype=jnp.float32),
    }


def network_wrapper_forward(batch, render_key):
    """Mirrors NetworkWrapper.forward(batch) -> (ret, loss, scalar_stats, image_stats)."""
    ret = synthetic_render(batch, render_key)

    scalar_stats = {}
    loss = jnp.float32(0.0)

    if "rgb0" in ret:
        # Fused: rgb streamed from HBM once, one pallas_call for both losses.
        img_loss, img_loss0 = fused_img2mse_pallas(
            (ret["rgb_map"], ret["rgb0"]), batch["rgb"])
        scalar_stats["img_loss"] = img_loss
        loss = loss + img_loss
        scalar_stats["img_loss0"] = img_loss0
        loss = loss + img_loss0
    else:
        # Fine-only path: single-prediction kernel (rgb_map streamed once).
        (img_loss,) = fused_img2mse_pallas((ret["rgb_map"],), batch["rgb"])
        scalar_stats["img_loss"] = img_loss
        loss = loss + img_loss

    scalar_stats["loss"] = loss
    image_stats = {}
    return ret, loss, scalar_stats, image_stats


if __name__ == "__main__":
    key = jax.random.PRNGKey(0)
    k_rgb, k_render = jax.random.split(key)

    # Small NeRF-style batch: 2 images' worth of 512 rays, 3 color channels.
    B, N_RAYS, C = 2, 512, 3
    batch = {"rgb": jax.random.uniform(k_rgb, (B, N_RAYS, C), dtype=jnp.float32)}

    ret, loss, scalar_stats, image_stats = jax.jit(network_wrapper_forward)(
        batch, k_render)
    jax.block_until_ready(loss)
    jax.block_until_ready(scalar_stats)

    # Cross-check against a plain-JAX reference.
    ref_img = jnp.mean((ret["rgb_map"] - batch["rgb"]) ** 2)
    ref_img0 = jnp.mean((ret["rgb0"] - batch["rgb"]) ** 2)
    ref_loss = ref_img + ref_img0
    assert jnp.allclose(scalar_stats["img_loss"], ref_img, rtol=1e-5, atol=1e-6)
    assert jnp.allclose(scalar_stats["img_loss0"], ref_img0, rtol=1e-5, atol=1e-6)
    assert jnp.allclose(loss, ref_loss, rtol=1e-5, atol=1e-6)

    print("KERNEL_OK")
</pallas_src>

<mosaic_0001>
module attributes {stable_mosaic.version = 11 : i64} {
  func.func @_fused_sse_kernel(%arg0: i32, %arg1: i32, %arg2: memref<24x128xf32, #tpu.memory_space<vmem>>, %arg3: memref<24x128xf32, #tpu.memory_space<vmem>>, %arg4: memref<24x128xf32, #tpu.memory_space<vmem>>, %arg5: memref<1x128xf32, #tpu.memory_space<vmem>>, %arg6: memref<1x128xf32, #tpu.memory_space<vmem>>, %arg7: memref<1x128xf32, #tpu.memory_space<vmem>>, %arg8: memref<1x128xf32, #tpu.memory_space<vmem>>) attributes {dimension_semantics = [#tpu.dimension_semantics<parallel>, #tpu.dimension_semantics<arbitrary>], iteration_bounds = array<i64: 1, 1>, scalar_prefetch = 0 : i64, scratch_operands = 2 : i64, tpu.core_type = #tpu.core_type<tc>, window_params = [{transform_indices = @transform_0, window_bounds = array<i64: 24, 128>}, {transform_indices = @transform_1, window_bounds = array<i64: 24, 128>}, {transform_indices = @transform_2, window_bounds = array<i64: 24, 128>}, {transform_indices = @transform_3, window_bounds = array<i64: 1, 128>}, {transform_indices = @transform_4, window_bounds = array<i64: 1, 128>}]} {
    %c1_i32 = arith.constant 1 : i32
    %0 = arith.muli %arg0, %c1_i32 : i32
    %1 = arith.addi %0, %arg1 : i32
    %c0_i32 = arith.constant 0 : i32
    %2 = arith.cmpi eq, %arg1, %c0_i32 : i32
    %3 = arith.extui %2 : i1 to i32
    %c0_i32_0 = arith.constant 0 : i32
    %4 = arith.cmpi ne, %3, %c0_i32_0 : i32
    scf.if %4 {
      %cst = arith.constant 0.000000e+00 : f32
      %11 = vector.broadcast %cst : f32 to vector<1x128xf32>
      %c0 = arith.constant 0 : index
      %c0_5 = arith.constant 0 : index
      %12 = vector.load %arg7[%c0, %c0_5] : memref<1x128xf32, #tpu.memory_space<vmem>>, vector<1x128xf32>
      tpu.vector_store %arg7[%c0, %c0_5], %11 {strides = array<i32>} : memref<1x128xf32, #tpu.memory_space<vmem>>, vector<1x128xf32>,
      %cst_6 = arith.constant 0.000000e+00 : f32
      %13 = vector.broadcast %cst_6 : f32 to vector<1x128xf32>
      %c0_7 = arith.constant 0 : index
      %c0_8 = arith.constant 0 : index
      %14 = vector.load %arg8[%c0_7, %c0_8] : memref<1x128xf32, #tpu.memory_space<vmem>>, vector<1x128xf32>
      tpu.vector_store %arg8[%c0_7, %c0_8], %13 {strides = array<i32>} : memref<1x128xf32, #tpu.memory_space<vmem>>, vector<1x128xf32>,
    } else {
    }
    %c1_i32_1 = arith.constant 1 : i32
    %5 = arith.cmpi slt, %1, %c1_i32_1 : i32
    %6 = arith.extui %5 : i1 to i32
    %c0_i32_2 = arith.constant 0 : i32
    %7 = arith.cmpi ne, %6, %c0_i32_2 : i32
    scf.if %7 {
      %c0 = arith.constant 0 : index
      %c0_5 = arith.constant 0 : index
      %11 = vector.load %arg4[%c0, %c0_5] : memref<24x128xf32, #tpu.memory_space<vmem>>, vector<24x128xf32>
      %c0_6 = arith.constant 0 : index
      %c0_7 = arith.constant 0 : index
      %12 = vector.load %arg2[%c0_6, %c0_7] : memref<24x128xf32, #tpu.memory_space<vmem>>, vector<24x128xf32>
      %13 = arith.subf %12, %11 : vector<24x128xf32>
      %14 = arith.mulf %13, %13 : vector<24x128xf32>
      %c0_8 = arith.constant 0 : index
      %c0_9 = arith.constant 0 : index
      %15 = vector.load %arg7[%c0_8, %c0_9] : memref<1x128xf32, #tpu.memory_space<vmem>>, vector<1x128xf32>
      %cst = arith.constant dense<0.000000e+00> : vector<128xf32>
      %16 = vector.multi_reduction <add>, %14, %cst [0] : vector<24x128xf32> to vector<128xf32>
      %17 = vector.shape_cast %16 : vector<128xf32> to vector<1x128xf32>
      %18 = arith.addf %15, %17 : vector<1x128xf32>
      %c0_10 = arith.constant 0 : index
      %c0_11 = arith.constant 0 : index
      %19 = vector.load %arg7[%c0_10, %c0_11] : memref<1x128xf32, #tpu.memory_space<vmem>>, vector<1x128xf32>
      tpu.vector_store %arg7[%c0_10, %c0_11], %18 {strides = array<i32>} : memref<1x128xf32, #tpu.memory_space<vmem>>, vector<1x128xf32>,
      %c0_12 = arith.constant 0 : index
      %c0_13 = arith.constant 0 : index
      %20 = vector.load %arg3[%c0_12, %c0_13] : memref<24x128xf32, #tpu.memory_space<vmem>>, vector<24x128xf32>
      %21 = arith.subf %20, %11 : vector<24x128xf32>
      %22 = arith.mulf %21, %21 : vector<24x128xf32>
      %c0_14 = arith.constant 0 : index
      %c0_15 = arith.constant 0 : index
      %23 = vector.load %arg8[%c0_14, %c0_15] : memref<1x128xf32, #tpu.memory_space<vmem>>, vector<1x128xf32>
      %cst_16 = arith.constant dense<0.000000e+00> : vector<128xf32>
      %24 = vector.multi_reduction <add>, %22, %cst_16 [0] : vector<24x128xf32> to vector<128xf32>
      %25 = vector.shape_cast %24 : vector<128xf32> to vector<1x128xf32>
      %26 = arith.addf %23, %25 : vector<1x128xf32>
      %c0_17 = arith.constant 0 : index
      %c0_18 = arith.constant 0 : index
      %27 = vector.load %arg8[%c0_17, %c0_18] : memref<1x128xf32, #tpu.memory_space<vmem>>, vector<1x128xf32>
      tpu.vector_store %arg8[%c0_17, %c0_18], %26 {strides = array<i32>} : memref<1x128xf32, #tpu.memory_space<vmem>>, vector<1x128xf32>,
    } else {
    }
    %c0_i32_3 = arith.constant 0 : i32
    %8 = arith.cmpi eq, %arg1, %c0_i32_3 : i32
    %9 = arith.extui %8 : i1 to i32
    %c0_i32_4 = arith.constant 0 : i32
    %10 = arith.cmpi ne, %9, %c0_i32_4 : i32
    scf.if %10 {
      %c0 = arith.constant 0 : index
      %c0_5 = arith.constant 0 : index
      %11 = vector.load %arg7[%c0, %c0_5] : memref<1x128xf32, #tpu.memory_space<vmem>>, vector<1x128xf32>
      %cst = arith.constant 3.25520843E-4 : f32
      %12 = vector.broadcast %cst : f32 to vector<1x128xf32>
      %13 = arith.mulf %11, %12 : vector<1x128xf32>
      %c0_6 = arith.constant 0 : index
      %c0_7 = arith.constant 0 : index
      %14 = vector.load %arg5[%c0_6, %c0_7] : memref<1x128xf32, #tpu.memory_space<vmem>>, vector<1x128xf32>
      tpu.vector_store %arg5[%c0_6, %c0_7], %13 {strides = array<i32>} : memref<1x128xf32, #tpu.memory_space<vmem>>, vector<1x128xf32>,
      %c0_8 = arith.constant 0 : index
      %c0_9 = arith.constant 0 : index
      %15 = vector.load %arg8[%c0_8, %c0_9] : memref<1x128xf32, #tpu.memory_space<vmem>>, vector<1x128xf32>
      %cst_10 = arith.constant 3.25520843E-4 : f32
      %16 = vector.broadcast %cst_10 : f32 to vector<1x128xf32>
      %17 = arith.mulf %15, %16 : vector<1x128xf32>
      %c0_11 = arith.constant 0 : index
      %c0_12 = arith.constant 0 : index
      %18 = vector.load %arg6[%c0_11, %c0_12] : memref<1x128xf32, #tpu.memory_space<vmem>>, vector<1x128xf32>
      tpu.vector_store %arg6[%c0_11, %c0_12], %17 {strides = array<i32>} : memref<1x128xf32, #tpu.memory_space<vmem>>, vector<1x128xf32>,
    } else {
    }
    return
  }
  func.func @transform_0(%arg0: i32, %arg1: i32) -> (i32, i32) {
    %c1_i32 = arith.constant 1 : i32
    %0 = arith.muli %arg0, %c1_i32 : i32
    %1 = arith.addi %0, %arg1 : i32
    %c0_i32 = arith.constant 0 : i32
    %c0_i32_0 = arith.constant 0 : i32
    return %1, %c0_i32 : i32, i32
  }
  func.func @transform_1(%arg0: i32, %arg1: i32) -> (i32, i32) {
    %c1_i32 = arith.constant 1 : i32
    %0 = arith.muli %arg0, %c1_i32 : i32
    %1 = arith.addi %0, %arg1 : i32
    %c0_i32 = arith.constant 0 : i32
    %c0_i32_0 = arith.constant 0 : i32
    return %1, %c0_i32 : i32, i32
  }
  func.func @transform_2(%arg0: i32, %arg1: i32) -> (i32, i32) {
    %c1_i32 = arith.constant 1 : i32
    %0 = arith.muli %arg0, %c1_i32 : i32
    %1 = arith.addi %0, %arg1 : i32
    %c0_i32 = arith.constant 0 : i32
    %c0_i32_0 = arith.constant 0 : i32
    return %1, %c0_i32 : i32, i32
  }
  func.func @transform_3(%arg0: i32, %arg1: i32) -> (i32, i32) {
    %c0_i32 = arith.constant 0 : i32
    %c0_i32_0 = arith.constant 0 : i32
    return %arg0, %c0_i32 : i32, i32
  }
  func.func @transform_4(%arg0: i32, %arg1: i32) -> (i32, i32) {
    %c0_i32 = arith.constant 0 : i32
    %c0_i32_0 = arith.constant 0 : i32
    return %arg0, %c0_i32 : i32, i32
  }
}

</mosaic_0001>

<llo_original>
// kernel: network_wrapper_forward.1
$region0: #{network_wrapper_forward.1}
  #allocation0 [shape = 'u32[]', space=smem, size = 0x4, offset = 0x4, fixed_abs, tag = 'smem constant byte address 0x4 - core index']
  #allocation1 [shape = 'u32[144,128]{1,0:T(1,128)}', space=vmem, size = 0x12000, scoped, tag = 'internal scratch']
  #allocation2 [shape = 'f32[1,128]{1,0:T(1,128)}', space=vmem, size = 0x200, scoped, tag = 'scratch operand']
  #allocation3 [shape = 'f32[1,128]{1,0:T(1,128)}', space=vmem, size = 0x200, scoped, tag = 'scratch operand']
  %s0 = inlined_call_operand.vmem [shape: f32[24,128], index: 0, kind: input, shape index: {}]
  %s1 = inlined_call_operand.vmem [shape: f32[24,128], index: 1, kind: input, shape index: {}]
  %s2 = inlined_call_operand.vmem [shape: f32[24,128], index: 2, kind: input, shape index: {}]
  %s3 = inlined_call_operand.vmem [shape: f32[1,128], index: 3, kind: output, shape index: {0}]
  %s4 = inlined_call_operand.vmem [shape: f32[1,128], index: 4, kind: output, shape index: {1}]
  %5 = xla_tuple %s3, %s4
  %s6 = sld [smem:[#allocation0]]
  $region42: #{network_wrapper_forward.1} parent=0
    _
  %s8 = ssub.s32 1, %s6
  %s9 = scalar_select 0, %s8, %s6
  // Predicated region
  $region2: #{network_wrapper_forward.1} parent=0 // pred_check
    _
  $region3: #{network_wrapper_forward.1} parent=0 // pred_check_branch
    %11 = sbr.rel (0) target = $region5
  $region4: #{network_wrapper_forward.1} parent=0 // pred_region
    %s12 = sadd.s32 0, 0
    %s13 = smul.u32 3, %s12
    %p14 = scmp.lt.s32.totalorder %s13, 2
    %s15 = scalar_select %p14, %s13, 2
    %s16 = smul.addr %s15, 8
    %s17 = scalar_lea.vmem %s0, %s16
    %s18 = sadd.s32 0, 0
    %s19 = smul.u32 3, %s18
  $region5: #{network_wrapper_forward.1} parent=0 // pred_fallthru
    _
  // Predicated region
  $region6: #{network_wrapper_forward.1} parent=0 // pred_check
    _
  $region7: #{network_wrapper_forward.1} parent=0 // pred_check_branch
    %21 = sbr.rel (0) target = $region9
  $region8: #{network_wrapper_forward.1} parent=0 // pred_region
    %s22 = sadd.s32 0, 0
    %s23 = smul.u32 3, %s22
    %p24 = scmp.lt.s32.totalorder %s23, 2
    %s25 = scalar_select %p24, %s23, 2
    %s26 = smul.addr %s25, 8
    %s27 = scalar_lea.vmem %s1, %s26
    %s28 = sadd.s32 0, 0
    %s29 = smul.u32 3, %s28
  $region9: #{network_wrapper_forward.1} parent=0 // pred_fallthru
    _
  // Predicated region
  $region10: #{network_wrapper_forward.1} parent=0 // pred_check
    _
  $region11: #{network_wrapper_forward.1} parent=0 // pred_check_branch
    %31 = sbr.rel (0) target = $region13
  $region12: #{network_wrapper_forward.1} parent=0 // pred_region
    %s32 = sadd.s32 0, 0
    %s33 = smul.u32 3, %s32
    %p34 = scmp.lt.s32.totalorder %s33, 2
    %s35 = scalar_select %p34, %s33, 2
    %s36 = smul.addr %s35, 8
    %s37 = scalar_lea.vmem %s2, %s36
    %s38 = sadd.s32 0, 0
    %s39 = smul.u32 3, %s38
  $region13: #{network_wrapper_forward.1} parent=0 // pred_fallthru
    _
  %s40 = sadd.s32 0, 0
  %s41 = smul.u32 3, %s40
  %p42 = scmp.lt.s32.totalorder %s41, 2
  %s43 = scalar_select %p42, %s41, 2
  %s44 = smul.addr %s43, 8
  %s45 = scalar_lea.vmem %s0, %s44
  %s46 = sadd.s32 0, 0
  %s47 = smul.u32 3, %s46
  %p48 = scmp.lt.s32.totalorder %s47, 2
  %s49 = scalar_select %p48, %s47, 2
  %s50 = smul.addr %s49, 8
  %s51 = scalar_lea.vmem %s1, %s50
  %s52 = sadd.s32 0, 0
  %s53 = smul.u32 3, %s52
  %p54 = scmp.lt.s32.totalorder %s53, 2
  %s55 = scalar_select %p54, %s53, 2
  %s56 = smul.addr %s55, 8
  %s57 = scalar_lea.vmem %s2, %s56
  %s58 = sadd.s32 0, 0
  %s59 = smul.u32 3, %s58
  %p60 = scmp.lt.s32.totalorder %s59, 2
  %s61 = scalar_select %p60, %s59, 2
  %s62 = smul.addr %s61, 8
  %s63 = scalar_lea.vmem %s0, %s62
  %s64 = sadd.s32 0, 0
  %s65 = smul.u32 3, %s64
  %s66 = sadd.s32 0, 0
  %s67 = smul.u32 3, %s66
  %p68 = scmp.lt.s32.totalorder %s67, 2
  %s69 = scalar_select %p68, %s67, 2
  %s70 = smul.addr %s69, 8
  %s71 = scalar_lea.vmem %s1, %s70
  %s72 = sadd.s32 0, 0
  %s73 = smul.u32 3, %s72
  %s74 = sadd.s32 0, 0
  %s75 = smul.u32 3, %s74
  %p76 = scmp.lt.s32.totalorder %s75, 2
  %s77 = scalar_select %p76, %s75, 2
  %s78 = smul.addr %s77, 8
  %s79 = scalar_lea.vmem %s2, %s78
  %s80 = sadd.s32 0, 0
  %s81 = smul.u32 3, %s80
  %s82 = sadd.s32 0, 0
  %p83 = scmp.eq.s32.totalorder 0, 0
  // Predicated region
  $region14: #{network_wrapper_forward.1} parent=0 // pred_check
    %p84 = pneg %p83
  $region15: #{network_wrapper_forward.1} parent=0 // pred_check_branch
    %86 = sbr.rel (%p84) target = $region17
  $region16: #{network_wrapper_forward.1} parent=0 // pred_region
    %87 = vst [vmem:[#allocation2] sm:$0x1] 0.0
    %88 = vst [vmem:[#allocation3] sm:$0x1] 0.0
  $region17: #{network_wrapper_forward.1} parent=0 // pred_fallthru
    _
  %p89 = scmp.lt.s32.totalorder %s82, 1
  // Predicated region
  $region18: #{network_wrapper_forward.1} parent=0 // pred_check
    %p90 = pneg %p89
  $region19: #{network_wrapper_forward.1} parent=0 // pred_check_branch
    %92 = sbr.rel (%p90) target = $region21
  $region20: #{network_wrapper_forward.1} parent=0 // pred_region
    %v93 = vld [vmem:[%s79] sm:$0xff]
    %v94 = vld [vmem:[%s79 + $0x8] sm:$0xff]
    %v95 = vld [vmem:[%s79 + $0x10] sm:$0xff]
    %v96 = vld [vmem:[%s63] sm:$0xff]
    %v97 = vld [vmem:[%s63 + $0x8] sm:$0xff]
    %v98 = vld [vmem:[%s63 + $0x10] sm:$0xff]
    %v99 = vsub.f32 %v96, %v93
    %v100 = vsub.f32 %v97, %v94
    %v101 = vsub.f32 %v98, %v95
    %v102 = vmul.f32 %v99, %v99
    %v103 = vmul.f32 %v100, %v100
    %v104 = vmul.f32 %v101, %v101
    %v105 = vld [vmem:[#allocation2] sm:$0x1]
    %v106 = vadd.f32 %v102, %v103
    %v107 = vadd.f32 %v106, %v104
    %v108 = vrot.slane %v107, 4
    %v109 = vadd.f32 %v107, %v108
    %v110 = vrot.slane %v109, 2
    %v111 = vadd.f32 %v109, %v110
    %v112 = vrot.slane %v111, 1
    %v113 = vadd.f32 %v111, %v112
    %v114 = vadd.f32 %v105, %v113
    %115 = vst [vmem:[#allocation2] sm:$0x1] %v114
    %v116 = vld [vmem:[%s71] sm:$0xff]
    %v117 = vld [vmem:[%s71 + $0x8] sm:$0xff]
    %v118 = vld [vmem:[%s71 + $0x10] sm:$0xff]
    %v119 = vsub.f32 %v116, %v93
    %v120 = vsub.f32 %v117, %v94
    %v121 = vsub.f32 %v118, %v95
    %v122 = vmul.f32 %v119, %v119
    %v123 = vmul.f32 %v120, %v120
    %v124 = vmul.f32 %v121, %v121
    %v125 = vld [vmem:[#allocation3] sm:$0x1]
    %v126 = vadd.f32 %v122, %v123
    %v127 = vadd.f32 %v126, %v124
    %v128 = vrot.slane %v127, 4
    %v129 = vadd.f32 %v127, %v128
    %v130 = vrot.slane %v129, 2
    %v131 = vadd.f32 %v129, %v130
    %v132 = vrot.slane %v131, 1
    %v133 = vadd.f32 %v131, %v132
    %v134 = vadd.f32 %v125, %v133
    %135 = vst [vmem:[#allocation3] sm:$0x1] %v134
  $region21: #{network_wrapper_forward.1} parent=0 // pred_fallthru
    _
  // Predicated region
  $region22: #{network_wrapper_forward.1} parent=0 // pred_check
    %p136 = pneg %p83
  $region23: #{network_wrapper_forward.1} parent=0 // pred_check_branch
    %138 = sbr.rel (%p136) target = $region25
  $region24: #{network_wrapper_forward.1} parent=0 // pred_region
    %v139 = vld [vmem:[#allocation2] sm:$0x1]
    %v140 = vmul.f32 %v139, 0.00032552084
    %141 = vst [vmem:[%s3] sm:$0x1] %v140
    %v142 = vld [vmem:[#allocation3] sm:$0x1]
    %v143 = vmul.f32 %v142, 0.00032552084
    %144 = vst [vmem:[%s4] sm:$0x1] %v143
  $region25: #{network_wrapper_forward.1} parent=0 // pred_fallthru
    _
  // Predicated region
  $region26: #{network_wrapper_forward.1} parent=0 // pred_check
    _
  $region27: #{network_wrapper_forward.1} parent=0 // pred_check_branch
    %146 = sbr.rel (0) target = $region29
  $region28: #{network_wrapper_forward.1} parent=0 // pred_region
    _
  $region29: #{network_wrapper_forward.1} parent=0 // pred_fallthru
    _
  // Predicated region
  $region30: #{network_wrapper_forward.1} parent=0 // pred_check
    _
  $region31: #{network_wrapper_forward.1} parent=0 // pred_check_branch
    %148 = sbr.rel (0) target = $region33
  $region32: #{network_wrapper_forward.1} parent=0 // pred_region
    _
  $region33: #{network_wrapper_forward.1} parent=0 // pred_fallthru
    _
  // Predicated region
  $region34: #{network_wrapper_forward.1} parent=0 // pred_check
    _
  $region35: #{network_wrapper_forward.1} parent=0 // pred_check_branch
    %150 = sbr.rel (0) target = $region37
  $region36: #{network_wrapper_forward.1} parent=0 // pred_region
    _
  $region37: #{network_wrapper_forward.1} parent=0 // pred_fallthru
    _
  // Predicated region
  $region38: #{network_wrapper_forward.1} parent=0 // pred_check
    _
  $region39: #{network_wrapper_forward.1} parent=0 // pred_check_branch
    %152 = sbr.rel (0) target = $region41
  $region40: #{network_wrapper_forward.1} parent=0 // pred_region
    _
  $region41: #{network_wrapper_forward.1} parent=0 // pred_fallthru
    _

</llo_original>
